<compile_context>
chip_gen: v7x
topology: tpu7x:2x2x1
jax: 0.10.0
libtpu: 0.0.40
codegen_flags: <defaults>
</compile_context>

<pallas_src>
import math
import functools

import jax
import jax.numpy as jnp
from jax.experimental import pallas as pl
from jax.experimental.pallas import tpu as pltpu

_VMEM_LIMIT = 48 * 1024 * 1024  # < v7x 64 MiB physical, > v5e 16 MiB default


# ------------------------------ tiling helper ------------------------------

def _pick_tile(dim, pref, granule):
    """Largest tile <= pref that divides dim (power-of-2 steps), else full dim."""
    if dim <= pref:
        return dim
    t = pref
    while t >= granule:
        if dim % t == 0:
            return t
        t //= 2
    return dim  # correctness fallback (rare, odd sizes)


# --------------- fused RMSNorm + matmul (norm hoisted to j==0) --------------
# x block is (tm, D) (resident across the column loop); the normalized row is
# computed once per row tile into a bf16 VMEM scratch and reused for every
# output-column tile.  Grid (rows, cols): rows parallel, cols arbitrary (the
# xn cache requires j to start at 0 on whichever core runs the row tile).

def _rmsnorm_matmul_kernel(x_ref, g_ref, w_ref, o_ref, xn_ref, *, eps):
    @pl.when(pl.program_id(1) == 0)
    def _():
        x = x_ref[...].astype(jnp.float32)                    # (tm, D)
        ms = jnp.mean(x * x, axis=-1, keepdims=True)
        xn_ref[...] = (x * jax.lax.rsqrt(ms + eps) * g_ref[...]
                       ).astype(xn_ref.dtype)

    o_ref[...] = jnp.dot(xn_ref[...], w_ref[...],
                         preferred_element_type=jnp.float32).astype(o_ref.dtype)


def rmsnorm_matmul(x2d, g, w, eps, out_dtype=None):
    n, d = x2d.shape
    dout = w.shape[1]
    out_dtype = out_dtype or x2d.dtype
    tm = _pick_tile(n, 512, 16)
    tn = _pick_tile(dout, 512, 128)
    g2 = g.reshape(1, d).astype(jnp.float32)
    return pl.pallas_call(
        functools.partial(_rmsnorm_matmul_kernel, eps=eps),
        out_shape=jax.ShapeDtypeStruct((n, dout), out_dtype),
        grid=(n // tm, dout // tn),
        in_specs=[pl.BlockSpec((tm, d), lambda i, j: (i, 0)),
                  pl.BlockSpec((1, d), lambda i, j: (0, 0)),
                  pl.BlockSpec((d, tn), lambda i, j: (0, j))],
        out_specs=pl.BlockSpec((tm, tn), lambda i, j: (i, j)),
        scratch_shapes=[pltpu.VMEM((tm, d), x2d.dtype)],
        compiler_params=pltpu.CompilerParams(
            dimension_semantics=("parallel", "arbitrary"),
            vmem_limit_bytes=_VMEM_LIMIT),
    )(x2d, g2, w)


# ------------- tiled matmul with K reduction + fused residual add -----------

def _matmul_res_kernel(x_ref, w_ref, r_ref, o_ref, acc_ref):
    @pl.when(pl.program_id(2) == 0)
    def _():
        acc_ref[...] = jnp.zeros_like(acc_ref)

    acc_ref[...] += jnp.dot(x_ref[...], w_ref[...],
                            preferred_element_type=jnp.float32)

    @pl.when(pl.program_id(2) == pl.num_programs(2) - 1)
    def _():
        o_ref[...] = (acc_ref[...] + r_ref[...].astype(jnp.float32)
                      ).astype(o_ref.dtype)


def matmul_residual(x2d, w, res, out_dtype=None):
    n, kdim = x2d.shape
    dout = w.shape[1]
    out_dtype = out_dtype or res.dtype
    tm = _pick_tile(n, 512, 16)
    tn = _pick_tile(dout, 512, 128)
    tk = _pick_tile(kdim, 512, 128)
    return pl.pallas_call(
        _matmul_res_kernel,
        out_shape=jax.ShapeDtypeStruct((n, dout), out_dtype),
        grid=(n // tm, dout // tn, kdim // tk),
        in_specs=[pl.BlockSpec((tm, tk), lambda i, j, k: (i, k)),
                  pl.BlockSpec((tk, tn), lambda i, j, k: (k, j)),
                  pl.BlockSpec((tm, tn), lambda i, j, k: (i, j))],
        out_specs=pl.BlockSpec((tm, tn), lambda i, j, k: (i, j)),
        scratch_shapes=[pltpu.VMEM((tm, tn), jnp.float32)],
        compiler_params=pltpu.CompilerParams(
            dimension_semantics=("parallel", "parallel", "arbitrary"),
            vmem_limit_bytes=_VMEM_LIMIT),
    )(x2d, w, res)


# ------------- fused SwiGLU + w2 matmul + residual (gate computed once) -----
# Grid (rows, hidden-K) with a full-width (tm, D) f32 accumulator: the gated
# activation silu(x@w1)*(x@w3) is computed exactly once per (i, k) tile and
# fed straight into the MXU; the (N, HD) intermediate never touches HBM.

def _swiglu_res_kernel(h1_ref, h3_ref, w2_ref, r_ref, o_ref, acc_ref):
    k = pl.program_id(1)

    @pl.when(k == 0)
    def _():
        acc_ref[...] = jnp.zeros_like(acc_ref)

    h1 = h1_ref[...].astype(jnp.float32)
    h3 = h3_ref[...].astype(jnp.float32)
    g = (h1 * jax.nn.sigmoid(h1)) * h3                        # SiLU(h1) * h3
    acc_ref[...] += jnp.dot(g.astype(w2_ref.dtype), w2_ref[...],
                            preferred_element_type=jnp.float32)

    @pl.when(k == pl.num_programs(1) - 1)
    def _():
        o_ref[...] = (acc_ref[...] + r_ref[...].astype(jnp.float32)
                      ).astype(o_ref.dtype)


def swiglu_matmul_residual(h13, w2, res, out_dtype=None):
    n, hd2 = h13.shape
    hd = hd2 // 2
    dout = w2.shape[1]
    out_dtype = out_dtype or res.dtype
    tm = _pick_tile(n, 256, 16)
    tk = _pick_tile(hd, 512, 128)
    nk = hd // tk
    return pl.pallas_call(
        _swiglu_res_kernel,
        out_shape=jax.ShapeDtypeStruct((n, dout), out_dtype),
        grid=(n // tm, nk),
        in_specs=[pl.BlockSpec((tm, tk), lambda i, k: (i, k)),        # h1 cols
                  pl.BlockSpec((tm, tk), lambda i, k: (i, k + nk)),   # h3 cols
                  pl.BlockSpec((tk, dout), lambda i, k: (k, 0)),
                  pl.BlockSpec((tm, dout), lambda i, k: (i, 0))],
        out_specs=pl.BlockSpec((tm, dout), lambda i, k: (i, 0)),
        scratch_shapes=[pltpu.VMEM((tm, dout), jnp.float32)],
        compiler_params=pltpu.CompilerParams(
            dimension_semantics=("parallel", "arbitrary"),
            vmem_limit_bytes=_VMEM_LIMIT),
    )(h13, h13, w2, res)


# --------- flash attention (causal, GQA group per KV head, clamped KV) ------
# q: (G, n_rep, S, Dh) with G = B * n_kv_heads; k, v: (G, S, Dh).  All n_rep
# query heads sharing a KV head are processed together, so each K/V tile is
# DMA'd once per group.  q is pre-scaled by 1/sqrt(Dh) in the RoPE glue.

def _flash_attn_kernel(q_ref, k_ref, v_ref, o_ref, m_sc, l_sc, acc_sc,
                       *, tq, tkv, n_rep, dh):
    qi = pl.program_id(1)
    ki = pl.program_id(2)

    @pl.when(ki == 0)
    def _():
        m_sc[...] = jnp.full_like(m_sc, -jnp.inf)
        l_sc[...] = jnp.zeros_like(l_sc)
        acc_sc[...] = jnp.zeros_like(acc_sc)

    # Skip kv tiles that lie entirely above the causal diagonal (their DMA is
    # also suppressed by the clamped index_map).
    @pl.when(ki * tkv <= qi * tq + (tq - 1))
    def _():
        q = q_ref[0].reshape(n_rep * tq, dh)                  # bf16, pre-scaled
        k = k_ref[0]                                          # (tkv, dh)
        v = v_ref[0]
        s = jax.lax.dot_general(q, k, (((1,), (1,)), ((), ())),
                                preferred_element_type=jnp.float32)
        ridx = jax.lax.broadcasted_iota(jnp.int32, s.shape, 0)
        row = qi * tq + jax.lax.rem(ridx, tq)
        col = ki * tkv + jax.lax.broadcasted_iota(jnp.int32, s.shape, 1)
        s = jnp.where(row >= col, s, -jnp.inf)

        m_prev = m_sc[...]
        m_new = jnp.maximum(m_prev, jnp.max(s, axis=-1, keepdims=True))
        alpha = jnp.exp(m_prev - m_new)
        p = jnp.exp(s - m_new)
        l_sc[...] = alpha * l_sc[...] + jnp.sum(p, axis=-1, keepdims=True)
        acc_sc[...] = alpha * acc_sc[...] + jnp.dot(
            p.astype(v.dtype), v, preferred_element_type=jnp.float32)
        m_sc[...] = m_new

    @pl.when(ki == pl.num_programs(2) - 1)
    def _():
        out = acc_sc[...] / l_sc[...]                         # exact normalize
        o_ref[0] = out.reshape(n_rep, tq, dh).astype(o_ref.dtype)


def flash_attention(q, k, v):
    g_dim, n_rep, s, dh = q.shape
    tq = _pick_tile(s, 256, 16)
    tkv = _pick_tile(s, 256, 16)

    def kv_map(g, qi, ki):
        kmax = (qi * tq + (tq - 1)) // tkv                    # last causal tile
        return (g, jnp.minimum(ki, kmax), 0)

    return pl.pallas_call(
        functools.partial(_flash_attn_kernel, tq=tq, tkv=tkv,
                          n_rep=n_rep, dh=dh),
        out_shape=jax.ShapeDtypeStruct((g_dim, n_rep, s, dh), q.dtype),
        grid=(g_dim, s // tq, s // tkv),
        in_specs=[pl.BlockSpec((1, n_rep, tq, dh),
                               lambda g, qi, ki: (g, 0, qi, 0)),
                  pl.BlockSpec((1, tkv, dh), kv_map),
                  pl.BlockSpec((1, tkv, dh), kv_map)],
        out_specs=pl.BlockSpec((1, n_rep, tq, dh),
                               lambda g, qi, ki: (g, 0, qi, 0)),
        scratch_shapes=[pltpu.VMEM((n_rep * tq, 1), jnp.float32),
                        pltpu.VMEM((n_rep * tq, 1), jnp.float32),
                        pltpu.VMEM((n_rep * tq, dh), jnp.float32)],
        compiler_params=pltpu.CompilerParams(
            dimension_semantics=("parallel", "parallel", "arbitrary")),
    )(q, k, v)


# -------- fused final-RMSNorm + output head + streaming cross-entropy -------
# One kernel: normalized row cached at j==0, vocab-tile matmul writes bf16
# logits, and the online logsumexp + target pick run in the same j loop, so
# the N x V logits are never re-read from HBM for the loss.

def _head_ce_kernel(x_ref, g_ref, w_ref, tgt_ref, logits_ref, nll_ref,
                    xn_ref, m_sc, l_sc, t_sc, *, eps, tv):
    j = pl.program_id(1)

    @pl.when(j == 0)
    def _():
        x = x_ref[...].astype(jnp.float32)
        ms = jnp.mean(x * x, axis=-1, keepdims=True)
        xn_ref[...] = (x * jax.lax.rsqrt(ms + eps) * g_ref[...]
                       ).astype(xn_ref.dtype)
        m_sc[...] = jnp.full_like(m_sc, -jnp.inf)
        l_sc[...] = jnp.zeros_like(l_sc)
        t_sc[...] = jnp.zeros_like(t_sc)

    z = jnp.dot(xn_ref[...], w_ref[...], preferred_element_type=jnp.float32)
    logits_ref[...] = z.astype(logits_ref.dtype)

    m_prev = m_sc[...]
    m_new = jnp.maximum(m_prev, jnp.max(z, axis=-1, keepdims=True))
    l_sc[...] = l_sc[...] * jnp.exp(m_prev - m_new) + jnp.sum(
        jnp.exp(z - m_new), axis=-1, keepdims=True)
    m_sc[...] = m_new

    col = j * tv + jax.lax.broadcasted_iota(jnp.int32, z.shape, 1)
    t_sc[...] += jnp.sum(jnp.where(col == tgt_ref[...], z, 0.0),
                         axis=-1, keepdims=True)

    @pl.when(j == pl.num_programs(1) - 1)
    def _():
        nll_ref[...] = (m_sc[...] + jnp.log(l_sc[...])) - t_sc[...]


def head_rmsnorm_ce(x2d, g, w, targets, eps, logits_dtype=None):
    n, d = x2d.shape
    v = w.shape[1]
    logits_dtype = logits_dtype or x2d.dtype
    tm = _pick_tile(n, 512, 16)
    tv = _pick_tile(v, 512, 128)
    g2 = g.reshape(1, d).astype(jnp.float32)
    t2 = targets.reshape(n, 1).astype(jnp.int32)
    return pl.pallas_call(
        functools.partial(_head_ce_kernel, eps=eps, tv=tv),
        out_shape=(jax.ShapeDtypeStruct((n, v), logits_dtype),
                   jax.ShapeDtypeStruct((n, 1), jnp.float32)),
        grid=(n // tm, v // tv),
        in_specs=[pl.BlockSpec((tm, d), lambda i, j: (i, 0)),
                  pl.BlockSpec((1, d), lambda i, j: (0, 0)),
                  pl.BlockSpec((d, tv), lambda i, j: (0, j)),
                  pl.BlockSpec((tm, 1), lambda i, j: (i, 0))],
        out_specs=(pl.BlockSpec((tm, tv), lambda i, j: (i, j)),
                   pl.BlockSpec((tm, 1), lambda i, j: (i, 0))),
        scratch_shapes=[pltpu.VMEM((tm, d), x2d.dtype),
                        pltpu.VMEM((tm, 1), jnp.float32),
                        pltpu.VMEM((tm, 1), jnp.float32),
                        pltpu.VMEM((tm, 1), jnp.float32)],
        compiler_params=pltpu.CompilerParams(
            dimension_semantics=("parallel", "arbitrary"),
            vmem_limit_bytes=_VMEM_LIMIT),
    )(x2d, g2, w, t2)


# ------------------------------ JAX-side glue ------------------------------

def precompute_rope(head_dim, end, theta=10000.0):
    freqs = 1.0 / theta ** (jnp.arange(0, head_dim, 2)[: head_dim // 2]
                            .astype(jnp.float32) / head_dim)
    t = jnp.arange(end, dtype=jnp.float32)
    f = jnp.outer(t, freqs)
    return jnp.cos(f), jnp.sin(f)


def apply_rope(x, cos, sin, scale=1.0):
    # x: (B, S, H, Dh); complex multiply over interleaved (even, odd) pairs,
    # matching torch.view_as_complex semantics.  `scale` folds 1/sqrt(Dh) into
    # q for free (saves a tq*tkv multiply per flash-attention step).
    # TODO(synk): RoPE rotation and the head-major transposes stay in XLA glue;
    # an in-kernel pltpu.roll variant would save ~1 HBM round trip per layer.
    b, s, h, dh = x.shape
    xr = x.astype(jnp.float32).reshape(b, s, h, dh // 2, 2)
    xe, xo = xr[..., 0], xr[..., 1]
    c = cos[None, :, None, :]
    sn = sin[None, :, None, :]
    ye = (xe * c - xo * sn) * scale
    yo = (xe * sn + xo * c) * scale
    return jnp.stack([ye, yo], axis=-1).reshape(b, s, h, dh).astype(x.dtype)


def ffn_hidden_dim(dim, multiple_of, ffn_dim_multiplier=None):
    hd = 4 * dim
    hd = int(2 * hd / 3)
    if ffn_dim_multiplier is not None:
        hd = int(ffn_dim_multiplier * hd)
    return multiple_of * ((hd + multiple_of - 1) // multiple_of)


def init_params(key, cfg):
    D, H, KH = cfg['dim'], cfg['n_heads'], cfg['n_kv_heads']
    Dh, V, S = D // H, cfg['vocab'], cfg['max_seq_len']
    HD = ffn_hidden_dim(D, cfg['multiple_of'], cfg.get('ffn_dim_multiplier'))
    keys = jax.random.split(key, 2 + cfg['n_layers'])

    def w(k, shape, scale=0.02):
        return (scale * jax.random.normal(k, shape, dtype=jnp.float32)
                ).astype(jnp.bfloat16)

    params = {
        'tok_emb': w(keys[0], (V, D)),
        'w_out': w(keys[1], (D, V)),
        'final_norm': jnp.ones((D,), jnp.float32),
    }
    layers = []
    for li in range(cfg['n_layers']):
        lk = jax.random.split(keys[2 + li], 7)
        wq = w(lk[0], (D, H * Dh))
        wk = w(lk[1], (D, KH * Dh))
        wv = w(lk[2], (D, KH * Dh))
        w1 = w(lk[4], (D, HD))
        w3 = w(lk[6], (D, HD))
        layers.append(dict(
            attn_norm=jnp.ones((D,), jnp.float32),
            ffn_norm=jnp.ones((D,), jnp.float32),
            wqkv=jnp.concatenate([wq, wk, wv], axis=1),   # fused QKV weight
            wo=w(lk[3], (H * Dh, D)),
            w13=jnp.concatenate([w1, w3], axis=1),        # fused gate/up weight
            w2=w(lk[5], (HD, D)),
        ))
    params['layers'] = layers
    cos, sin = precompute_rope(Dh, S * 2, cfg['rope_theta'])
    params['rope_cos'] = cos
    params['rope_sin'] = sin
    return params


def llama3_forward(params, cfg, tokens, targets):
    B, S = tokens.shape
    D, H, KH = cfg['dim'], cfg['n_heads'], cfg['n_kv_heads']
    Dh = D // H
    n_rep = H // KH
    N = B * S
    V = cfg['vocab']
    q_scale = 1.0 / math.sqrt(Dh)

    h2d = params['tok_emb'][tokens].reshape(N, D)        # (N, D) bf16 gather (glue)
    cos = params['rope_cos'][:S]
    sin = params['rope_sin'][:S]

    for lp in params['layers']:
        # --- attention sub-block: fused RMSNorm + QKV projection ---
        qkv = rmsnorm_matmul(h2d, lp['attn_norm'], lp['wqkv'], cfg['eps'])
        q = qkv[:, :H * Dh].reshape(B, S, H, Dh)
        k = qkv[:, H * Dh:(H + KH) * Dh].reshape(B, S, KH, Dh)
        v = qkv[:, (H + KH) * Dh:].reshape(B, S, KH, Dh)
        q = apply_rope(q, cos, sin, scale=q_scale)       # 1/sqrt(Dh) folded here
        k = apply_rope(k, cos, sin)
        # GQA grouping: (B, H, S, Dh) -> (B*KH, n_rep, S, Dh); KV: (B*KH, S, Dh)
        qg = q.transpose(0, 2, 1, 3).reshape(B * KH, n_rep, S, Dh)
        kg = k.transpose(0, 2, 1, 3).reshape(B * KH, S, Dh)
        vg = v.transpose(0, 2, 1, 3).reshape(B * KH, S, Dh)
        attn = flash_attention(qg, kg, vg)               # (B*KH, n_rep, S, Dh)
        attn2d = (attn.reshape(B, KH, n_rep, S, Dh)
                      .transpose(0, 3, 1, 2, 4)
                      .reshape(N, H * Dh))
        # wo projection with fused residual add
        h2d = matmul_residual(attn2d, lp['wo'], h2d)
        # dropout_rate = 0.0 -> F.dropout is the identity here.

        # --- feed-forward: fused RMSNorm + [w1|w3], fused SwiGLU@w2 + residual ---
        h13 = rmsnorm_matmul(h2d, lp['ffn_norm'], lp['w13'], cfg['eps'])
        h2d = swiglu_matmul_residual(h13, lp['w2'], h2d)

    # final norm + output head + cross-entropy fused in one kernel
    logits2d, nll = head_rmsnorm_ce(h2d, params['final_norm'], params['w_out'],
                                    targets.reshape(-1), cfg['eps'])
    loss = jnp.mean(nll)
    return logits2d.reshape(B, S, V), loss


# TODO(synk): inference path (KV cache / start_pos, generate, tokenizer) is not
# implemented; this covers the training forward (start_pos=None) of the module.

if __name__ == "__main__":
    cfg = dict(dim=32, n_heads=4, n_kv_heads=2, n_layers=2, vocab=64,
               max_seq_len=8, multiple_of=16, eps=1e-6, rope_theta=10000.0)
    key = jax.random.PRNGKey(0)
    kp, kt, kg = jax.random.split(key, 3)
    params = init_params(kp, cfg)
    B, S = 2, cfg['max_seq_len']          # seqlen must equal max_seq_len
    tokens = jax.random.randint(kt, (B, S), 0, cfg['vocab'], dtype=jnp.int32)
    targets = jax.random.randint(kg, (B, S), 0, cfg['vocab'], dtype=jnp.int32)

    logits, loss = llama3_forward(params, cfg, tokens, targets)
    jax.block_until_ready((logits, loss))
    assert logits.shape == (B, S, cfg['vocab'])
    assert loss.shape == ()
    assert bool(jnp.isfinite(loss))
    print("KERNEL_OK")
</pallas_src>

<mosaic_0001>
module attributes {stable_mosaic.version = 11 : i64} {
  func.func @_rmsnorm_matmul_kernel(%arg0: i32, %arg1: i32, %arg2: memref<16x32xbf16, #tpu.memory_space<vmem>>, %arg3: memref<1x32xf32, #tpu.memory_space<vmem>>, %arg4: memref<32x64xbf16, #tpu.memory_space<vmem>>, %arg5: memref<16x64xbf16, #tpu.memory_space<vmem>>, %arg6: memref<16x32xbf16, #tpu.memory_space<vmem>>) attributes {dimension_semantics = [#tpu.dimension_semantics<parallel>, #tpu.dimension_semantics<arbitrary>], iteration_bounds = array<i64: 1, 1>, scalar_prefetch = 0 : i64, scratch_operands = 1 : i64, tpu.core_type = #tpu.core_type<tc>, window_params = [{transform_indices = @transform_0, window_bounds = array<i64: 16, 32>}, {pipeline_mode = #tpu.pipeline_mode<synchronous>, transform_indices = @transform_1, window_bounds = array<i64: 1, 32>}, {transform_indices = @transform_2, window_bounds = array<i64: 32, 64>}, {transform_indices = @transform_3, window_bounds = array<i64: 16, 64>}]} {
    %c0_i32 = arith.constant 0 : i32
    %0 = arith.cmpi eq, %arg1, %c0_i32 : i32
    %1 = arith.extui %0 : i1 to i32
    %c0_i32_0 = arith.constant 0 : i32
    %2 = arith.cmpi ne, %1, %c0_i32_0 : i32
    scf.if %2 {
      %c0_6 = arith.constant 0 : index
      %c0_7 = arith.constant 0 : index
      %8 = vector.load %arg2[%c0_6, %c0_7] : memref<16x32xbf16, #tpu.memory_space<vmem>>, vector<16x32xbf16>
      %9 = arith.extf %8 : vector<16x32xbf16> to vector<16x32xf32>
      %10 = arith.mulf %9, %9 : vector<16x32xf32>
      %cst_8 = arith.constant dense<0.000000e+00> : vector<16xf32>
      %11 = vector.multi_reduction <add>, %10, %cst_8 [1] : vector<16x32xf32> to vector<16xf32>
      %12 = vector.shape_cast %11 : vector<16xf32> to vector<16x1xf32>
      %cst_9 = arith.constant 3.200000e+01 : f32
      %13 = vector.broadcast %cst_9 : f32 to vector<16x1xf32>
      %14 = arith.divf %12, %13 : vector<16x1xf32>
      %cst_10 = arith.constant 9.99999997E-7 : f32
      %15 = vector.broadcast %cst_10 : f32 to vector<16x1xf32>
      %16 = arith.addf %14, %15 : vector<16x1xf32>
      %17 = math.rsqrt %16 : vector<16x1xf32>
      %18 = vector.broadcast %17 : vector<16x1xf32> to vector<16x32xf32>
      %19 = arith.mulf %9, %18 : vector<16x32xf32>
      %c0_11 = arith.constant 0 : index
      %c0_12 = arith.constant 0 : index
      %20 = vector.load %arg3[%c0_11, %c0_12] : memref<1x32xf32, #tpu.memory_space<vmem>>, vector<1x32xf32>
      %21 = vector.broadcast %20 : vector<1x32xf32> to vector<16x32xf32>
      %22 = arith.mulf %19, %21 : vector<16x32xf32>
      %23 = arith.truncf %22 : vector<16x32xf32> to vector<16x32xbf16>
      %c0_13 = arith.constant 0 : index
      %c0_14 = arith.constant 0 : index
      %24 = vector.load %arg6[%c0_13, %c0_14] : memref<16x32xbf16, #tpu.memory_space<vmem>>, vector<16x32xbf16>
      tpu.vector_store %arg6[%c0_13, %c0_14], %23 {strides = array<i32>} : memref<16x32xbf16, #tpu.memory_space<vmem>>, vector<16x32xbf16>,
    } else {
    }
    %c0 = arith.constant 0 : index
    %c0_1 = arith.constant 0 : index
    %3 = vector.load %arg6[%c0, %c0_1] : memref<16x32xbf16, #tpu.memory_space<vmem>>, vector<16x32xbf16>
    %c0_2 = arith.constant 0 : index
    %c0_3 = arith.constant 0 : index
    %4 = vector.load %arg4[%c0_2, %c0_3] : memref<32x64xbf16, #tpu.memory_space<vmem>>, vector<32x64xbf16>
    %cst = arith.constant dense<0.000000e+00> : vector<16x64xf32>
    %5 = tpu.matmul %3, %4, %cst {dimension_numbers = #tpu.dot_dimension_numbers<[1], [0], [0], [1], [0, 0, 1, 1], [], []>} : vector<16x32xbf16>, vector<32x64xbf16>, vector<16x64xf32> -> vector<16x64xf32>
    %6 = arith.truncf %5 : vector<16x64xf32> to vector<16x64xbf16>
    %c0_4 = arith.constant 0 : index
    %c0_5 = arith.constant 0 : index
    %7 = vector.load %arg5[%c0_4, %c0_5] : memref<16x64xbf16, #tpu.memory_space<vmem>>, vector<16x64xbf16>
    tpu.vector_store %arg5[%c0_4, %c0_5], %6 {strides = array<i32>} : memref<16x64xbf16, #tpu.memory_space<vmem>>, vector<16x64xbf16>,
    return
  }
  func.func @transform_0(%arg0: i32, %arg1: i32) -> (i32, i32) {
    %c0_i32 = arith.constant 0 : i32
    %c0_i32_0 = arith.constant 0 : i32
    return %arg0, %c0_i32 : i32, i32
  }
  func.func @transform_1(%arg0: i32, %arg1: i32) -> (i32, i32) {
    %c0_i32 = arith.constant 0 : i32
    %c0_i32_0 = arith.constant 0 : i32
    %c0_i32_1 = arith.constant 0 : i32
    return %c0_i32, %c0_i32_0 : i32, i32
  }
  func.func @transform_2(%arg0: i32, %arg1: i32) -> (i32, i32) {
    %c0_i32 = arith.constant 0 : i32
    %c0_i32_0 = arith.constant 0 : i32
    return %c0_i32, %arg1 : i32, i32
  }
  func.func @transform_3(%arg0: i32, %arg1: i32) -> (i32, i32) {
    %c0_i32 = arith.constant 0 : i32
    return %arg0, %arg1 : i32, i32
  }
}

</mosaic_0001>

<llo_original>
// kernel: tpu_custom_call.1
$region0: #{tpu_custom_call.1}
  #allocation0 [shape = 'u32[]', space=smem, size = 0x4, offset = 0x4, fixed_abs, tag = 'smem constant byte address 0x4 - core index']
  #allocation1 [shape = 'u32[144,128]{1,0:T(1,128)}', space=vmem, size = 0x12000, scoped, tag = 'internal scratch']
  #allocation2 [shape = 'bf16[16,32]{1,0:T(16,128)(2,1)}', space=vmem, size = 0x1000, scoped, tag = 'scratch operand']
  %s0 = inlined_call_operand.hbm [shape: bf16[16,32], index: 0, kind: input, shape index: {}]
  %s1 = inlined_call_operand.vmem [shape: f32[1,32], index: 1, kind: input, shape index: {}]
  %s2 = inlined_call_operand.hbm [shape: bf16[32,64], index: 2, kind: input, shape index: {}]
  %s3 = inlined_call_operand.hbm [shape: bf16[16,64], index: 3, kind: output, shape index: {}]
  %s4 = sld [smem:[#allocation0]]
  $region34: #{tpu_custom_call.1} parent=0
    _
  %s6 = ssub.s32 1, %s4
  %s7 = scalar_select 0, %s6, %s4
  $region1: #{tpu_custom_call.1} parent=0
    #allocation3 [shape = 'u8[4096]{0}', space=vmem, size = 0x1000, scoped, tag = 'input window, operand 0, single buffered']
    #allocation4 [shape = 's32[1]{0}', space=sflag, size = 0x4, scoped, tag = 'scoped memory for tpu_custom_call.1']
    #allocation5 [shape = 's32[1]{0}', space=sflag, size = 0x4, scoped, tag = 'scoped memory for tpu_custom_call.1']
    #allocation6 [shape = 'u8[8192]{0}', space=vmem, size = 0x2000, scoped, tag = 'input window, operand 2, single buffered']
    #allocation7 [shape = 's32[1]{0}', space=sflag, size = 0x4, scoped, tag = 'scoped memory for tpu_custom_call.1']
    #allocation8 [shape = 'u8[4096]{0}', space=vmem, size = 0x1000, scoped, tag = 'output window, operand 0, single buffered']
    %8 = vsyncpa [#allocation4], 0
    %9 = vsyncpa [#allocation7], 0
    %10 = vsyncpa [#allocation5], 0
    // Predicated region
    $region2: #{tpu_custom_call.1} parent=1 // pred_check
      _
    $region3: #{tpu_custom_call.1} parent=1 // pred_check_branch
      %12 = sbr.rel (0) target = $region5
    $region4: #{tpu_custom_call.1} parent=1 // pred_region
      %s14 = ssub.s32 128, 128
      %15 = vsyncadd [#allocation4], %s14
      %s16 = sshll.u32 [#allocation3], 4
      %s17 = int_to_ptr.vmem [resolvable:$true] %s16
      %22 = dma.hbm_to_vmem [thread:$0]  %s0, 128, %s17, [#allocation4], 64, 64, 4
    $region5: #{tpu_custom_call.1} parent=1 // pred_fallthru
      _
    // Predicated region
    $region6: #{tpu_custom_call.1} parent=1 // pred_check
      _
    $region7: #{tpu_custom_call.1} parent=1 // pred_check_branch
      %24 = sbr.rel (0) target = $region9
    $region8: #{tpu_custom_call.1} parent=1 // pred_region
      _
    $region9: #{tpu_custom_call.1} parent=1 // pred_fallthru
      _
    // Predicated region
    $region10: #{tpu_custom_call.1} parent=1 // pred_check
      _
    $region11: #{tpu_custom_call.1} parent=1 // pred_check_branch
      %26 = sbr.rel (0) target = $region13
    $region12: #{tpu_custom_call.1} parent=1 // pred_region
      %s28 = ssub.s32 256, 256
      %29 = vsyncadd [#allocation7], %s28
      %s30 = sshll.u32 [#allocation6], 4
      %s31 = int_to_ptr.vmem [resolvable:$true] %s30
      %36 = dma.hbm_to_vmem [thread:$0]  %s2, 256, %s31, [#allocation7], 64, 64, 4
    $region13: #{tpu_custom_call.1} parent=1 // pred_fallthru
      _
    // Predicated region
    $region14: #{tpu_custom_call.1} parent=1 // pred_check
      _
    $region15: #{tpu_custom_call.1} parent=1 // pred_check_branch
      %38 = sbr.rel (0) target = $region17
    $region16: #{tpu_custom_call.1} parent=1 // pred_region
      %39 = dma.done [#allocation4], 128
    $region17: #{tpu_custom_call.1} parent=1 // pred_fallthru
      _
    // Predicated region
    $region18: #{tpu_custom_call.1} parent=1 // pred_check
      _
    $region19: #{tpu_custom_call.1} parent=1 // pred_check_branch
      %41 = sbr.rel (0) target = $region21
    $region20: #{tpu_custom_call.1} parent=1 // pred_region
      %42 = dma.done [#allocation7], 256
    $region21: #{tpu_custom_call.1} parent=1 // pred_fallthru
      _
    %p44 = scmp.eq.s32.totalorder 0, 0
    // Predicated region
    $region22: #{tpu_custom_call.1} parent=1 // pred_check
      %p45 = pneg %p44
    $region23: #{tpu_custom_call.1} parent=1 // pred_check_branch
      %47 = sbr.rel (%p45) target = $region25
    $region24: #{tpu_custom_call.1} parent=1 // pred_region
      %v48 = vld [vmem:[#allocation3] sm:$0xf]
      %v49 = vld [vmem:[#allocation3 + $0x4] sm:$0xf]
      %v50 = vunpack.c.l.bf16 %v48
      %v51 = vunpack.c.l.bf16 %v49
      %v52 = vmul.f32 %v50, %v50
      %v53 = vmul.f32 %v51, %v51
      %vm54 = vcmask 261120
      %v55 = vsel %vm54, %v52, 0.0
      %56 = vadd.xlane.f32.xlu0 %v55
      %v57 = vpop.xlane.xlu0 %56
      %v58 = vsel %vm54, %v53, 0.0
      %59 = vadd.xlane.f32.xlu0 %v58
      %v60 = vpop.xlane.xlu0 %59
      %v61 = vrcp.pop 32.0
      %v62 = vmul.f32 %v57, %v61
      %v63 = vmul.f32 %v60, %v61
      %v64 = vadd.f32 %v62, 1e-06
      %v65 = vadd.f32 %v63, 1e-06
      %v66 = vrsqrt.pop %v64
      %v67 = vrsqrt.pop %v65
      %v68 = vmul.f32 %v50, %v66
      %v69 = vmul.f32 %v51, %v67
      %v70 = vld [vmem:[%s1] sm:$0x1]
      %v72 = vlaneseq
      %v73 = vshrl.u32 %v72, 7
      %v74 = vsub.s32 0, %v73
      %v75 = vrot.slane %v70, %v74
      %v77 = vmul.f32 %v68, %v75
      %v78 = vmul.f32 %v69, %v75
      %v79 = vpack.c.bf16 %v78, %v77
      %80 = vst.msk [vmem:[#allocation2] sm:$0xff] %vm54, %v79
    $region25: #{tpu_custom_call.1} parent=1 // pred_fallthru
      _
    %v81 = vld [vmem:[#allocation2] sm:$0xff]
    %v82 = vld [vmem:[#allocation6] sm:$0xf]
    %v83 = vld [vmem:[#allocation6 + $0x4] sm:$0xf]
    %v84 = vld [vmem:[#allocation6 + $0x8] sm:$0xf]
    %v85 = vld [vmem:[#allocation6 + $0xc] sm:$0xf]
    %v90 = vunpack.c.l.b16 %v82
    %v91 = vunpack.c.l.b16 %v83
    %v92 = vunpack.c.l.b16 %v84
    %v93 = vunpack.c.l.b16 %v85
    %v94 = vpack.c.b16 %v91, %v90
    %v95 = vpack.c.b16 %v93, %v92
    %vm98 = vcmask 261120
    %v100 = vsel %vm98, %v81, 0
    %102 = vmatprep.subr.bf16.mxu0 0
    %103 = vmatpush1.bf16.msra.mxu0 %v94
    %104 = vmatprep.subr.bf16.mxu0 0
    %105 = vmatpush1.bf16.msra.mxu0 %v95
    %106 = vmatprep.subr.bf16.mxu0 0
    %107 = vmatpush1.bf16.msra.mxu0 0
    %108 = vmatprep.subr.bf16.mxu0 0
    %109 = vmatpush1.bf16.msra.mxu0 0
    %110 = vmatprep.subr.bf16.mxu0 0
    %111 = vmatpush1.bf16.msra.mxu0 0
    %112 = vmatprep.subr.bf16.mxu0 0
    %113 = vmatpush1.bf16.msra.mxu0 0
    %114 = vmatprep.subr.bf16.mxu0 0
    %115 = vmatpush1.bf16.msra.mxu0 0
    %116 = vmatprep.subr.bf16.mxu0 0
    %117 = vmatpush1.bf16.msra.mxu0 0
    %118 = vmatprep.subr.bf16.mxu0 0
    %119 = vmatpush1.bf16.msra.mxu0 0
    %120 = vmatprep.subr.bf16.mxu0 0
    %121 = vmatpush1.bf16.msra.mxu0 0
    %122 = vmatprep.subr.bf16.mxu0 0
    %123 = vmatpush1.bf16.msra.mxu0 0
    %124 = vmatprep.subr.bf16.mxu0 0
    %125 = vmatpush1.bf16.msra.mxu0 0
    %126 = vmatprep.subr.bf16.mxu0 0
    %127 = vmatpush1.bf16.msra.mxu0 0
    %128 = vmatprep.subr.bf16.mxu0 0
    %129 = vmatpush1.bf16.msra.mxu0 0
    %130 = vmatprep.subr.bf16.mxu0 0
    %131 = vmatpush1.bf16.msra.mxu0 0
    %132 = vmatprep.subr.bf16.mxu0 0
    %133 = vmatpush1.bf16.msra.mxu0 0
    %134 = vmatprep.mubr.bf16.mxu0 0
    %135 = vmatmul.mubr.bf16.gmra.mrb[0].mxu0 %v100
    %v136 = vpop.f32.mrb[0].mxu0
    %v137 = vadd.f32 0.0, %v136
    %v138 = vpop.f32.mrb[0].mxu0
    %v139 = vpop.f32.mrb[0].mxu0
    %v140 = vadd.f32 0.0, %v139
    %v141 = vpop.f32.mrb[0].mxu0
    %142 = vdwg.mxu0
    %v143 = vpack.c.bf16 %v140, %v137
    %v145 = vunpack.c.l.b16 %v143
    %v146 = vunpack.c.h.b16 %v143
    %v147 = vpack.c.b16 %v145, %v145
    %v148 = vpack.c.b16 %v146, %v146
    %vm151 = vcmask 519168
    %152 = vst.msk [vmem:[#allocation8] sm:$0xf] %vm151, %v147
    %153 = vst.msk [vmem:[#allocation8 + $0x4] sm:$0xf] %vm151, %v148
    // Predicated region
    $region26: #{tpu_custom_call.1} parent=1 // pred_check
      _
    $region27: #{tpu_custom_call.1} parent=1 // pred_check_branch
      %155 = sbr.rel (0) target = $region29
    $region28: #{tpu_custom_call.1} parent=1 // pred_region
      %s157 = ssub.s32 128, 128
      %158 = vsyncadd [#allocation5], %s157
      %s159 = sshll.u32 [#allocation8], 4
      %s160 = int_to_ptr.vmem [resolvable:$true] %s159
      %165 = dma.vmem_to_hbm [thread:$0]  %s160, 128, %s3, [#allocation5], 64, 64, 4
    $region29: #{tpu_custom_call.1} parent=1 // pred_fallthru
      _
    // Predicated region
    $region30: #{tpu_custom_call.1} parent=1 // pred_check
      _
    $region31: #{tpu_custom_call.1} parent=1 // pred_check_branch
      %167 = sbr.rel (0) target = $region33
    $region32: #{tpu_custom_call.1} parent=1 // pred_region
      %168 = dma.done [#allocation5], 128
    $region33: #{tpu_custom_call.1} parent=1 // pred_fallthru
      _
    %169 = vsyncpa [#allocation4], 1
    %170 = vsyncpa [#allocation7], 1
    %171 = vsyncpa [#allocation5], 1

</llo_original>
